<compile_context>
chip_gen: v7x
topology: tpu7x:2x2x1
jax: 0.10.0
libtpu: 0.0.40
codegen_flags: <defaults>
</compile_context>

<pallas_src>
import functools

import jax
import jax.numpy as jnp
from jax import lax
from jax.experimental import pallas as pl
from jax.experimental.pallas import tpu as pltpu


def _round_up(n, m):
    return ((n + m - 1) // m) * m


def _vmem_capacity_bytes():
    """VMEM capacity of the local TPU, with a conservative (v7x) fallback."""
    try:
        info = pltpu.get_tpu_info()
        cap = int(getattr(info, "vmem_capacity_bytes", 0) or 0)
        if cap > 0:
            return cap
    except Exception:
        pass
    return 64 * 1024 * 1024


def _choose_tiles(B, K, C, in_itemsize, out_itemsize, budget, big_vmem):
    """Pick (tb, tk, tc).

    Dims whose rounded tile would exceed the whole array fall back to the full
    dim (always layout-legal); otherwise tb is a multiple of 8 and tk / a split
    tc are multiples of 128 (lane-dense stores, aligned MXU tiles).
    """
    tb_cap = 512 if big_vmem else 256     # v5e/v6e can afford wider tiles
    tk_cap = 512 if big_vmem else 256

    tb = min(tb_cap, _round_up(B, 8))
    if tb > B:
        tb = B                            # full dim: legal even if not %8
    tk = min(tk_cap, _round_up(K, 128))
    if tk > K:
        tk = K                            # full dim: legal even if not %128
    tc = C                                # full channel dim resident by default

    def footprint(tb_, tk_, tc_):
        return (2 * (tb_ + tk_) * tc_ * in_itemsize   # double-buffered x/y tiles
                + 2 * tb_ * tk_ * out_itemsize        # double-buffered out tile
                + tb_ * tk_ * 4                       # f32 accumulator scratch
                + 2 * (tb_ + tk_) * 4)                # inv_x / inv_y tiles

    # 1) give back the opportunistic >256 growth first
    while footprint(tb, tk, tc) > budget and (tb > 256 or tk > 256):
        if tk > 256:
            tk = 256
        else:
            tb = 256
    # 2) split the contraction dim (keeps MXU-sized output tiles for large C)
    while footprint(tb, tk, tc) > budget and tc > 128:
        tc = max(128, _round_up(tc // 2, 128))
    # 3) last resort: shrink the output tile
    while footprint(tb, tk, tc) > budget and (tb > 8 or tk > 128):
        if tb > 8:
            tb = max(8, _round_up(tb // 2, 8))
        else:
            tk = max(128, _round_up(tk // 2, 128))
    return tb, tk, tc


def _similarity_kernel(x_ref, y_ref, inv_x_ref, inv_y_ref, o_ref, acc_ref,
                       *, n_c, c_rem):
    """One (tb, tk) output tile of sim = (x @ y.T) * inv_x * inv_y.

    x_ref     : (tb, tc) rows of x, native dtype
    y_ref     : (tk, tc) rows of y, native dtype
    inv_x_ref : (tb, 1)  f32  rsqrt(||x_row||^2) / temp   (hoisted, incl. temp)
    inv_y_ref : (1, tk)  f32  rsqrt(||y_row||^2)          (hoisted)
    o_ref     : (tb, tk) output tile
    acc_ref   : (tb, tk) f32 accumulator (used only when the C axis is split)
    """
    c = pl.program_id(2)

    x = x_ref[...]          # native dtype straight into the MXU
    y = y_ref[...]

    if c_rem:
        # The last C block is ragged: boundary-padding values are unspecified,
        # so zero the tail of BOTH operands (garbage * 0 could still be NaN).
        valid = jnp.where(c == n_c - 1, c_rem, x.shape[1])
        x = jnp.where(lax.broadcasted_iota(jnp.int32, x.shape, 1) < valid,
                      x, jnp.zeros_like(x))
        y = jnp.where(lax.broadcasted_iota(jnp.int32, y.shape, 1) < valid,
                      y, jnp.zeros_like(y))

    # 'bc,kc->bk': contract the last dims of both operands directly on the MXU
    # (NT form); no transposed copy of the y tile is materialized.
    partial = lax.dot_general(
        x, y,
        dimension_numbers=(((1,), (1,)), ((), ())),
        preferred_element_type=jnp.float32,
    )  # (tb, tk) f32

    if n_c == 1:
        # Channel dim fully resident: single-shot epilogue, accumulator unused.
        o_ref[...] = (partial * inv_x_ref[...] * inv_y_ref[...]).astype(o_ref.dtype)
    else:
        @pl.when(c == 0)
        def _init():
            acc_ref[...] = jnp.zeros_like(acc_ref)

        acc_ref[...] += partial

        @pl.when(c == n_c - 1)
        def _finalize():
            o_ref[...] = (acc_ref[...] * inv_x_ref[...]
                          * inv_y_ref[...]).astype(o_ref.dtype)


def similarity(x, y, temp, *, out_dtype=None, tiles=None, vmem_limit_bytes=None):
    """cos_sim(x, y) / temp.   x: (B, C), y: (K, C)  ->  (B, K).

    Equivalent to the PyTorch module:
        x = F.normalize(x, dim=1); y = F.normalize(y, dim=1)
        return einsum('bc,kc->bk', x, y) / temp
    """
    if x.ndim != 2 or y.ndim != 2:
        raise ValueError("x and y must be rank-2 (batch, channels)")
    B, C = x.shape
    K, Cy = y.shape
    if C != Cy:
        raise ValueError("x and y must share the channel dimension")
    if x.dtype != y.dtype:
        common = jnp.promote_types(x.dtype, y.dtype)
        x, y = x.astype(common), y.astype(common)
    if out_dtype is None:
        out_dtype = x.dtype          # result dtype follows the inputs (torch-like)
    in_itemsize = jnp.dtype(x.dtype).itemsize
    out_itemsize = jnp.dtype(out_dtype).itemsize

    # ---- hoisted per-row normalization (one fused XLA pass per operand) -----
    # eps^2 clamp on the sum-of-squares matches torch F.normalize (eps = 1e-12).
    # 1/temp is folded into inv_x, so temp may be a traced scalar.
    eps2 = 1e-24
    xf = x.astype(jnp.float32)
    yf = y.astype(jnp.float32)
    inv_x = lax.rsqrt(jnp.maximum(jnp.sum(xf * xf, axis=1, keepdims=True), eps2))
    inv_x = inv_x / temp                                   # (B, 1) f32, row scale
    inv_y = lax.rsqrt(jnp.maximum(jnp.sum(yf * yf, axis=1, keepdims=True), eps2))
    inv_y = inv_y.reshape(1, K)                            # (1, K) f32, col scale

    # ---- generation-aware VMEM budget & tile selection -----------------------
    vmem_cap = _vmem_capacity_bytes()
    big_vmem = vmem_cap >= 96 * 1024 * 1024      # v5e/v6e: 128 MiB; v7x: 64 MiB
    if vmem_limit_bytes is None:
        vmem_limit_bytes = min(int(0.75 * vmem_cap), 100 * 1024 * 1024)
    budget = int(0.8 * vmem_limit_bytes)
    if tiles is None:
        tb, tk, tc = _choose_tiles(B, K, C, in_itemsize, out_itemsize, budget,
                                   big_vmem)
    else:
        tb, tk, tc = tiles

    gb = pl.cdiv(B, tb)
    gk = pl.cdiv(K, tk)
    gc = pl.cdiv(C, tc)
    c_rem = C % tc if gc > 1 else 0

    # ---- grid-axis order: minimize HBM re-reads ------------------------------
    # The operand tied to the inner (second) grid axis is re-fetched once per
    # outer block; with a split C axis both operands are re-fetched regardless.
    x_bytes, y_bytes = B * C * in_itemsize, K * C * in_itemsize
    traffic_x_outer = x_bytes * (1 if gc == 1 else gk) + y_bytes * gb
    traffic_y_outer = y_bytes * (1 if gc == 1 else gb) + x_bytes * gk
    x_outer = traffic_x_outer <= traffic_y_outer

    if x_outer:
        grid = (gb, gk, gc)
        x_spec = pl.BlockSpec((tb, tc), lambda i, j, c: (i, c))
        y_spec = pl.BlockSpec((tk, tc), lambda i, j, c: (j, c))
        ivx_spec = pl.BlockSpec((tb, 1), lambda i, j, c: (i, 0))
        ivy_spec = pl.BlockSpec((1, tk), lambda i, j, c: (0, j))
        out_spec = pl.BlockSpec((tb, tk), lambda i, j, c: (i, j))
    else:
        grid = (gk, gb, gc)
        x_spec = pl.BlockSpec((tb, tc), lambda j, i, c: (i, c))
        y_spec = pl.BlockSpec((tk, tc), lambda j, i, c: (j, c))
        ivx_spec = pl.BlockSpec((tb, 1), lambda j, i, c: (i, 0))
        ivy_spec = pl.BlockSpec((1, tk), lambda j, i, c: (0, j))
        out_spec = pl.BlockSpec((tb, tk), lambda j, i, c: (i, j))

    # TODO(synk): if profiling shows the inner-operand DMA exposed (tiny C on
    # v6e), add pipeline_mode=pl.Buffered(3) to that BlockSpec.

    kernel = functools.partial(_similarity_kernel, n_c=gc, c_rem=c_rem)

    cost = pl.CostEstimate(
        flops=int(2 * B * K * C),
        transcendentals=0,
        bytes_accessed=int(min(traffic_x_outer, traffic_y_outer)
                           + (B + K) * 4
                           + B * K * out_itemsize),
    )

    return pl.pallas_call(
        kernel,
        out_shape=jax.ShapeDtypeStruct((B, K), out_dtype),
        grid_spec=pltpu.PrefetchScalarGridSpec(
            num_scalar_prefetch=0,
            grid=grid,
            in_specs=[x_spec, y_spec, ivx_spec, ivy_spec],
            out_specs=out_spec,
            scratch_shapes=[pltpu.VMEM((tb, tk), jnp.float32)],
        ),
        compiler_params=pltpu.CompilerParams(
            dimension_semantics=("parallel", "parallel", "arbitrary"),
            vmem_limit_bytes=int(vmem_limit_bytes),
        ),
        cost_estimate=cost,
    )(x, y, inv_x, inv_y)


def _reference(x, y, temp):
    eps = 1e-12
    x = x.astype(jnp.float32)
    y = y.astype(jnp.float32)
    xn = x / jnp.maximum(jnp.linalg.norm(x, axis=1, keepdims=True), eps)
    yn = y / jnp.maximum(jnp.linalg.norm(y, axis=1, keepdims=True), eps)
    return (xn @ yn.T) / temp


if __name__ == "__main__":
    key = jax.random.PRNGKey(0)
    kx, ky = jax.random.split(key)

    temp = 0.05                      # temperature hyperparameter from __init__
    B, K, C = 8, 8, 32               # small (batch, hidden) shapes for forward()

    x = jax.random.normal(kx, (B, C), dtype=jnp.float32)
    y = jax.random.normal(ky, (K, C), dtype=jnp.float32)

    out = jax.block_until_ready(similarity(x, y, temp))
    ref = _reference(x, y, temp)
    assert out.shape == (B, K)
    assert jnp.allclose(out, ref, atol=1e-4, rtol=1e-4), "f32 mismatch vs reference"

    # Ragged B/K shapes exercise the partial-block path (no wrapper-side padding).
    x2 = jax.random.normal(kx, (10, 48), dtype=jnp.float32)
    y2 = jax.random.normal(ky, (12, 48), dtype=jnp.float32)
    out2 = jax.block_until_ready(similarity(x2, y2, temp))
    ref2 = _reference(x2, y2, temp)
    assert out2.shape == (10, 12)
    assert jnp.allclose(out2, ref2, atol=1e-4, rtol=1e-4), "ragged mismatch vs reference"

    # Forced C-split with a ragged channel tail exercises the accumulator +
    # in-kernel masking path.
    x4 = jax.random.normal(kx, (16, 300), dtype=jnp.float32)
    y4 = jax.random.normal(ky, (24, 300), dtype=jnp.float32)
    out4 = jax.block_until_ready(similarity(x4, y4, temp, tiles=(16, 24, 128)))
    ref4 = _reference(x4, y4, temp)
    assert out4.shape == (16, 24)
    assert jnp.allclose(out4, ref4, atol=1e-4, rtol=1e-4), "C-split mismatch vs reference"

    # bf16 inputs: bf16 MXU operands, f32 accumulation, input-dtype output.
    xb, yb = x.astype(jnp.bfloat16), y.astype(jnp.bfloat16)
    out3 = jax.block_until_ready(similarity(xb, yb, temp))
    ref3 = _reference(xb, yb, temp)
    assert jnp.allclose(out3.astype(jnp.float32), ref3, atol=0.5, rtol=5e-2), \
        "bf16 mismatch vs reference"

    print("KERNEL_OK")
</pallas_src>

<mosaic_0001>
module attributes {stable_mosaic.version = 11 : i64} {
  func.func @_similarity_kernel(%arg0: i32, %arg1: i32, %arg2: i32, %arg3: memref<8x32xf32, #tpu.memory_space<vmem>>, %arg4: memref<8x32xf32, #tpu.memory_space<vmem>>, %arg5: memref<8x1xf32, #tpu.memory_space<vmem>>, %arg6: memref<1x8xf32, #tpu.memory_space<vmem>>, %arg7: memref<8x8xf32, #tpu.memory_space<vmem>>, %arg8: memref<8x8xf32, #tpu.memory_space<vmem>>) attributes {dimension_semantics = [#tpu.dimension_semantics<parallel>, #tpu.dimension_semantics<parallel>, #tpu.dimension_semantics<arbitrary>], iteration_bounds = array<i64: 1, 1, 1>, scalar_prefetch = 0 : i64, scratch_operands = 1 : i64, tpu.core_type = #tpu.core_type<tc>, window_params = [{transform_indices = @transform_0, window_bounds = array<i64: 8, 32>}, {transform_indices = @transform_1, window_bounds = array<i64: 8, 32>}, {transform_indices = @transform_2, window_bounds = array<i64: 8, 1>}, {transform_indices = @transform_3, window_bounds = array<i64: 1, 8>}, {transform_indices = @transform_4, window_bounds = array<i64: 8, 8>}]} {
    %c0 = arith.constant 0 : index
    %c0_0 = arith.constant 0 : index
    %0 = vector.load %arg3[%c0, %c0_0] : memref<8x32xf32, #tpu.memory_space<vmem>>, vector<8x32xf32>
    %c0_1 = arith.constant 0 : index
    %c0_2 = arith.constant 0 : index
    %1 = vector.load %arg4[%c0_1, %c0_2] : memref<8x32xf32, #tpu.memory_space<vmem>>, vector<8x32xf32>
    %cst = arith.constant dense<0.000000e+00> : vector<8x8xf32>
    %2 = tpu.matmul %0, %1, %cst {dimension_numbers = #tpu.dot_dimension_numbers<[1], [1], [0], [0], [0, 0, 1, 0], [], []>} : vector<8x32xf32>, vector<8x32xf32>, vector<8x8xf32> -> vector<8x8xf32>
    %c0_3 = arith.constant 0 : index
    %c0_4 = arith.constant 0 : index
    %3 = vector.load %arg5[%c0_3, %c0_4] : memref<8x1xf32, #tpu.memory_space<vmem>>, vector<8x1xf32>
    %4 = vector.broadcast %3 : vector<8x1xf32> to vector<8x8xf32>
    %5 = arith.mulf %2, %4 : vector<8x8xf32>
    %c0_5 = arith.constant 0 : index
    %c0_6 = arith.constant 0 : index
    %6 = vector.load %arg6[%c0_5, %c0_6] : memref<1x8xf32, #tpu.memory_space<vmem>>, vector<1x8xf32>
    %7 = vector.broadcast %6 : vector<1x8xf32> to vector<8x8xf32>
    %8 = arith.mulf %5, %7 : vector<8x8xf32>
    %c0_7 = arith.constant 0 : index
    %c0_8 = arith.constant 0 : index
    %9 = vector.load %arg7[%c0_7, %c0_8] : memref<8x8xf32, #tpu.memory_space<vmem>>, vector<8x8xf32>
    tpu.vector_store %arg7[%c0_7, %c0_8], %8 {strides = array<i32>} : memref<8x8xf32, #tpu.memory_space<vmem>>, vector<8x8xf32>,
    return
  }
  func.func @transform_0(%arg0: i32, %arg1: i32, %arg2: i32) -> (i32, i32) {
    %c0_i32 = arith.constant 0 : i32
    return %arg0, %arg2 : i32, i32
  }
  func.func @transform_1(%arg0: i32, %arg1: i32, %arg2: i32) -> (i32, i32) {
    %c0_i32 = arith.constant 0 : i32
    return %arg1, %arg2 : i32, i32
  }
  func.func @transform_2(%arg0: i32, %arg1: i32, %arg2: i32) -> (i32, i32) {
    %c0_i32 = arith.constant 0 : i32
    %c0_i32_0 = arith.constant 0 : i32
    return %arg0, %c0_i32 : i32, i32
  }
  func.func @transform_3(%arg0: i32, %arg1: i32, %arg2: i32) -> (i32, i32) {
    %c0_i32 = arith.constant 0 : i32
    %c0_i32_0 = arith.constant 0 : i32
    return %c0_i32, %arg1 : i32, i32
  }
  func.func @transform_4(%arg0: i32, %arg1: i32, %arg2: i32) -> (i32, i32) {
    %c0_i32 = arith.constant 0 : i32
    return %arg0, %arg1 : i32, i32
  }
}

</mosaic_0001>

<llo_original>
// kernel: tpu_custom_call.1
$region0: #{tpu_custom_call.1}
  #allocation0 [shape = 'u32[]', space=smem, size = 0x4, offset = 0x4, fixed_abs, tag = 'smem constant byte address 0x4 - core index']
  #allocation1 [shape = 'u32[144,128]{1,0:T(1,128)}', space=vmem, size = 0x12000, scoped, tag = 'internal scratch']
  #allocation2 [shape = 'f32[8,8]{1,0:T(8,128)}', space=vmem, size = 0x1000, scoped, tag = 'scratch operand']
  %s0 = inlined_call_operand.vmem [shape: f32[8,32], index: 0, kind: input, shape index: {}]
  %s1 = inlined_call_operand.hbm [shape: f32[8,32], index: 1, kind: input, shape index: {}]
  %s2 = inlined_call_operand.vmem [shape: f32[8,1], index: 2, kind: input, shape index: {}]
  %s3 = inlined_call_operand.vmem [shape: f32[1,8], index: 3, kind: input, shape index: {}]
  %s4 = inlined_call_operand.hbm [shape: f32[8,8], index: 4, kind: output, shape index: {}]
  %s5 = sld [smem:[#allocation0]]
  $region30: #{tpu_custom_call.1} parent=0
    _
  %s7 = ssub.s32 1, %s5
  %s8 = scalar_select 0, %s7, %s5
  $region1: #{tpu_custom_call.1} parent=0
    #allocation3 [shape = 'u8[4096]{0}', space=vmem, size = 0x1000, scoped, tag = 'input window, operand 1, single buffered']
    #allocation4 [shape = 's32[1]{0}', space=sflag, size = 0x4, scoped, tag = 'scoped memory for tpu_custom_call.1']
    #allocation5 [shape = 's32[1]{0}', space=sflag, size = 0x4, scoped, tag = 'scoped memory for tpu_custom_call.1']
    #allocation6 [shape = 'u8[4096]{0}', space=vmem, size = 0x1000, scoped, tag = 'output window, operand 0, single buffered']
    %9 = vsyncpa [#allocation4], 0
    %10 = vsyncpa [#allocation5], 0
    // Predicated region
    $region2: #{tpu_custom_call.1} parent=1 // pred_check
      _
    $region3: #{tpu_custom_call.1} parent=1 // pred_check_branch
      %12 = sbr.rel (0) target = $region5
    $region4: #{tpu_custom_call.1} parent=1 // pred_region
      _
    $region5: #{tpu_custom_call.1} parent=1 // pred_fallthru
      _
    // Predicated region
    $region6: #{tpu_custom_call.1} parent=1 // pred_check
      _
    $region7: #{tpu_custom_call.1} parent=1 // pred_check_branch
      %14 = sbr.rel (0) target = $region9
    $region8: #{tpu_custom_call.1} parent=1 // pred_region
      %s16 = ssub.s32 128, 128
      %17 = vsyncadd [#allocation4], %s16
      %s19 = sshll.u32 [#allocation3], 4
      %s20 = int_to_ptr.vmem [resolvable:$true] %s19
      %22 = dma.hbm_to_vmem [thread:$0]  %s1, 128, %s20, [#allocation4]
    $region9: #{tpu_custom_call.1} parent=1 // pred_fallthru
      _
    // Predicated region
    $region10: #{tpu_custom_call.1} parent=1 // pred_check
      _
    $region11: #{tpu_custom_call.1} parent=1 // pred_check_branch
      %24 = sbr.rel (0) target = $region13
    $region12: #{tpu_custom_call.1} parent=1 // pred_region
      _
    $region13: #{tpu_custom_call.1} parent=1 // pred_fallthru
      _
    // Predicated region
    $region14: #{tpu_custom_call.1} parent=1 // pred_check
      _
    $region15: #{tpu_custom_call.1} parent=1 // pred_check_branch
      %26 = sbr.rel (0) target = $region17
    $region16: #{tpu_custom_call.1} parent=1 // pred_region
      _
    $region17: #{tpu_custom_call.1} parent=1 // pred_fallthru
      _
    // Predicated region
    $region18: #{tpu_custom_call.1} parent=1 // pred_check
      _
    $region19: #{tpu_custom_call.1} parent=1 // pred_check_branch
      %28 = sbr.rel (0) target = $region21
    $region20: #{tpu_custom_call.1} parent=1 // pred_region
      %29 = dma.done [#allocation4], 128
    $region21: #{tpu_custom_call.1} parent=1 // pred_fallthru
      _
    %v30 = vld [vmem:[%s0] sm:$0xff]
    %v31 = vld [vmem:[#allocation3] sm:$0xff]
    %vm32 = vcmask 261120
    %v34 = vsel %vm32, %v30, 0
    %v37 = vsel %vm32, %v31, 0
    %39 = vmatprep.subr.mxu0 0.0
    %40 = vmatpush1.xpose.msra.mxu0 %v37
    %41 = vmatprep.subr.mxu0 0.0
    %42 = vmatpush1.xpose.msra.mxu0 0.0
    %43 = vmatprep.subr.mxu0 0.0
    %44 = vmatpush1.xpose.msra.mxu0 0.0
    %45 = vmatprep.subr.mxu0 0.0
    %46 = vmatpush1.xpose.msra.mxu0 0.0
    %47 = vmatprep.subr.mxu0 0.0
    %48 = vmatpush1.xpose.msra.mxu0 0.0
    %49 = vmatprep.subr.mxu0 0.0
    %50 = vmatpush1.xpose.msra.mxu0 0.0
    %51 = vmatprep.subr.mxu0 0.0
    %52 = vmatpush1.xpose.msra.mxu0 0.0
    %53 = vmatprep.subr.mxu0 0.0
    %54 = vmatpush1.xpose.msra.mxu0 0.0
    %55 = vmatprep.subr.mxu0 0.0
    %56 = vmatpush1.xpose.msra.mxu0 0.0
    %57 = vmatprep.subr.mxu0 0.0
    %58 = vmatpush1.xpose.msra.mxu0 0.0
    %59 = vmatprep.subr.mxu0 0.0
    %60 = vmatpush1.xpose.msra.mxu0 0.0
    %61 = vmatprep.subr.mxu0 0.0
    %62 = vmatpush1.xpose.msra.mxu0 0.0
    %63 = vmatprep.subr.mxu0 0.0
    %64 = vmatpush1.xpose.msra.mxu0 0.0
    %65 = vmatprep.subr.mxu0 0.0
    %66 = vmatpush1.xpose.msra.mxu0 0.0
    %67 = vmatprep.subr.mxu0 0.0
    %68 = vmatpush1.xpose.msra.mxu0 0.0
    %69 = vmatprep.subr.mxu0 0.0
    %70 = vmatpush1.xpose.msra.mxu0 0.0
    %71 = vmatprep.subr.mxu0 0.0
    %72 = vmatpush1.xpose.msra.mxu0 0.0
    %73 = vmatprep.subr.mxu0 0.0
    %74 = vmatpush1.xpose.msra.mxu0 0.0
    %75 = vmatprep.subr.mxu0 0.0
    %76 = vmatpush1.xpose.msra.mxu0 0.0
    %77 = vmatprep.subr.mxu0 0.0
    %78 = vmatpush1.xpose.msra.mxu0 0.0
    %79 = vmatprep.subr.mxu0 0.0
    %80 = vmatpush1.xpose.msra.mxu0 0.0
    %81 = vmatprep.subr.mxu0 0.0
    %82 = vmatpush1.xpose.msra.mxu0 0.0
    %83 = vmatprep.subr.mxu0 0.0
    %84 = vmatpush1.xpose.msra.mxu0 0.0
    %85 = vmatprep.subr.mxu0 0.0
    %86 = vmatpush1.xpose.msra.mxu0 0.0
    %87 = vmatprep.subr.mxu0 0.0
    %88 = vmatpush1.xpose.msra.mxu0 0.0
    %89 = vmatprep.subr.mxu0 0.0
    %90 = vmatpush1.xpose.msra.mxu0 0.0
    %91 = vmatprep.subr.mxu0 0.0
    %92 = vmatpush1.xpose.msra.mxu0 0.0
    %93 = vmatprep.subr.mxu0 0.0
    %94 = vmatpush1.xpose.msra.mxu0 0.0
    %95 = vmatprep.subr.mxu0 0.0
    %96 = vmatpush1.xpose.msra.mxu0 0.0
    %97 = vmatprep.subr.mxu0 0.0
    %98 = vmatpush1.xpose.msra.mxu0 0.0
    %99 = vmatprep.subr.mxu0 0.0
    %100 = vmatpush1.xpose.msra.mxu0 0.0
    %101 = vmatprep.subr.mxu0 0.0
    %102 = vmatpush1.xpose.msra.mxu0 0.0
    %103 = vmatprep.mubr.f32.mxu0 0.0
    %104 = vmatmul.mubr.f32.gmra.mrb[0].mxu0 %v34
    %v105 = vpop.f32.mrb[0].mxu0
    %v106 = vadd.f32 0.0, %v105
    %v107 = vpop.f32.mrb[0].mxu0
    %108 = vdwg.mxu0
    %v109 = vld [vmem:[%s2] sm:$0xff]
    %111 = vset.pattern.permute.xlu0 0
    %112 = vperm.xlu0 %111, %v109
    %v113 = vpop.permute.xlu0 %112
    %v115 = vmul.f32 %v106, %v113
    %v116 = vld [vmem:[%s3] sm:$0x1]
    %v118 = vlaneseq
    %v119 = vshrl.u32 %v118, 7
    %v120 = vsub.s32 0, %v119
    %v121 = vrot.slane %v116, %v120
    %v123 = vmul.f32 %v115, %v121
    %vm124 = vcmask 64512
    %125 = vst.msk [vmem:[#allocation6] sm:$0xff] %vm124, %v123
    // Predicated region
    $region22: #{tpu_custom_call.1} parent=1 // pred_check
      _
    $region23: #{tpu_custom_call.1} parent=1 // pred_check_branch
      %127 = sbr.rel (0) target = $region25
    $region24: #{tpu_custom_call.1} parent=1 // pred_region
      %s129 = ssub.s32 128, 128
      %130 = vsyncadd [#allocation5], %s129
      %s132 = sshll.u32 [#allocation6], 4
      %s133 = int_to_ptr.vmem [resolvable:$true] %s132
      %135 = dma.vmem_to_hbm [thread:$0]  %s133, 128, %s4, [#allocation5]
    $region25: #{tpu_custom_call.1} parent=1 // pred_fallthru
      _
    // Predicated region
    $region26: #{tpu_custom_call.1} parent=1 // pred_check
      _
    $region27: #{tpu_custom_call.1} parent=1 // pred_check_branch
      %137 = sbr.rel (0) target = $region29
    $region28: #{tpu_custom_call.1} parent=1 // pred_region
      %138 = dma.done [#allocation5], 128
    $region29: #{tpu_custom_call.1} parent=1 // pred_fallthru
      _
    %139 = vsyncpa [#allocation4], 1
    %140 = vsyncpa [#allocation5], 1

</llo_original>
